<compile_context>
chip_gen: v5e
topology: v5e:2x2
jax: 0.10.0
libtpu: 0.0.40
codegen_flags: <defaults>
</compile_context>

<pallas_src>
import functools

import jax
import jax.numpy as jnp
from jax.experimental import pallas as pl
from jax.experimental.pallas import tpu as pltpu

_LANE = 128


def _round_up(n, m):
    return ((n + m - 1) // m) * m


def _bilinear_kernel(drv_ref, rep_ref, wmat_ref, brow_ref, selt_ref, ot_ref,
                     *, class_num, bias_on_rep):
    # drv_ref : (TB, Dd)     native dtype  -> driver of the big MXU matmul
    # rep_ref : (TB, Kp)     native dtype  -> replicated per class (Kp = multiple of 128)
    # wmat_ref: (Dd, C*Kp)   native dtype  (class-major columns; bias column folded in order B)
    # brow_ref: (1,  C*Kp)   f32           (bias row for order A / bias-slot one-hots for order B)
    # selt_ref: (Cp, C*Kp)   f32           per-class chunk-sum selector (transposed)
    # ot_ref  : (Cp, TB)                   transposed, lane-dense output
    z = jnp.dot(drv_ref[...], wmat_ref[...],
                preferred_element_type=jnp.float32)                  # (TB, C*Kp) f32 on MXU

    rep32 = rep_ref[...].astype(jnp.float32)                         # upcast once at (TB, Kp)
    repc = jnp.concatenate([rep32] * class_num, axis=1)              # 128-aligned vreg copies

    brow = brow_ref[...]                                             # (1, C*Kp) broadcast row
    if bias_on_rep:
        repc = repc + brow
    else:
        z = z + brow

    prod = repc * z                                                  # (TB, C*Kp) f32 VPU

    # Per-class chunk reduction on the MXU, producing the transposed result so the
    # store is lane-dense (batch tile on the lane axis) and N = TB, not class_num.
    out_t = jax.lax.dot_general(
        selt_ref[...], prod,
        dimension_numbers=(((1,), (1,)), ((), ())),                  # selT @ prod^T
        preferred_element_type=jnp.float32)                          # (Cp, TB)
    ot_ref[...] = out_t.astype(ot_ref.dtype)


def bilinear_layer(x, y, weight, bias, class_num, *, block_b=4096,
                   compute_dtype=None,
                   vmem_budget_bytes=24 * 1024 * 1024,
                   vmem_limit_bytes=32 * 1024 * 1024):
    """x: (B, x_size), y: (B, y_size), weight: (x_size*class_num, y_size),
    bias: (x_size*class_num,). Returns (B, class_num) (squeezed if class_num == 1)."""
    B, H = x.shape
    Y = y.shape[1]
    C = class_num
    assert weight.shape == (H * C, Y)
    assert bias.shape == (H * C,)

    out_dtype = x.dtype
    cdt = jnp.dtype(compute_dtype) if compute_dtype is not None else jnp.dtype(x.dtype)

    Cp = _round_up(C, 8)                       # pad class rows -> fully dense (8, TB) stores
    w3 = weight.reshape(C, H, Y).astype(jnp.float32)   # w3[c, h, k] = W[c*H + h, k]
    b2 = bias.reshape(C, H).astype(jnp.float32)        # b2[c, h]    = bias[c*H + h]

    kp_a = _round_up(H, _LANE)                 # order A: replicate x, chunks of width Hp
    kp_b = _round_up(Y + 1, _LANE)             # order B: replicate y (+1 bias slot), width Yp
    use_order_a = (C * kp_a) <= (C * kp_b)     # replicate the smaller (padded) side

    if use_order_a:
        kp, dd = kp_a, Y
        drv, rep, rep_w = y, x, H
        # wmat[k, c*kp + h] = W[c*H + h, k] (zero in padded h); bias folded as row-add on z.
        wmat = jnp.transpose(jnp.pad(w3, ((0, 0), (0, kp - H), (0, 0))),
                             (2, 0, 1)).reshape(Y, C * kp)
        brow = jnp.pad(b2, ((0, 0), (0, kp - H))).reshape(1, C * kp)
        bias_on_rep = False
    else:
        kp, dd = kp_b, H
        drv, rep, rep_w = x, y, Y
        # wmat[h, c*kp + k] = W[c*H + h, k] for k < Y, bias[c*H + h] at k == Y, else 0.
        wt = jnp.transpose(w3, (1, 0, 2))                                   # (H, C, Y)
        wt = jnp.concatenate([wt, jnp.transpose(b2, (1, 0))[:, :, None]], axis=2)
        wmat = jnp.pad(wt, ((0, 0), (0, 0), (0, kp - (Y + 1)))).reshape(H, C * kp)
        # rep is zero at column Y (padding), so adding this 0/1 row injects the bias term.
        brow = (jnp.arange(C * kp) % kp == Y).astype(jnp.float32)[None, :]
        bias_on_rep = True

    ck = C * kp
    selt = (jnp.arange(Cp)[:, None] == (jnp.arange(ck) // kp)[None, :]).astype(jnp.float32)

    # --- batch tiling: VMEM-budget-derived, dtype-aware, >= 2 steps when possible ---
    itemsize = jnp.dtype(cdt).itemsize
    align = {1: 32, 2: 16, 4: 8}.get(itemsize, 8)      # sublane packing per dtype
    b_min = _round_up(B, align)
    if b_min <= _LANE:
        tb = b_pad = b_min                              # tiny batch: one small step
    else:
        # double-buffered ins/outs + ~3 f32 intermediates (z, rep, prod) per batch row
        row_bytes = (2 * itemsize * (dd + kp)
                     + 2 * jnp.dtype(out_dtype).itemsize * Cp
                     + 3 * 4 * ck)
        tb_cap = max(_LANE, min(block_b, vmem_budget_bytes // row_bytes))
        tb_cap = (tb_cap // _LANE) * _LANE
        # cap at ~B/2 so the "parallel" batch axis has >= 2 steps (v7x megacore)
        tb = max(_LANE, min(tb_cap, _round_up((B + 1) // 2, _LANE)))
        b_pad = _round_up(B, tb)

    drv = drv.astype(cdt)
    rep = rep.astype(cdt)
    wmat = wmat.astype(cdt)
    if b_pad != B:
        drv = jnp.pad(drv, ((0, b_pad - B), (0, 0)))
    if b_pad != B or kp != rep_w:
        rep = jnp.pad(rep, ((0, b_pad - B), (0, kp - rep_w)))

    kernel = functools.partial(_bilinear_kernel, class_num=C, bias_on_rep=bias_on_rep)
    grid = (b_pad // tb,)

    def _call(single_buffer_consts):
        if single_buffer_consts:
            def const_spec(shape):
                return pl.BlockSpec(shape, lambda i: (0, 0),
                                    pipeline_mode=pl.Buffered(1))
        else:
            def const_spec(shape):
                return pl.BlockSpec(shape, lambda i: (0, 0))
        out = pl.pallas_call(
            kernel,
            out_shape=jax.ShapeDtypeStruct((Cp, b_pad), out_dtype),
            grid_spec=pltpu.PrefetchScalarGridSpec(
                num_scalar_prefetch=0,
                grid=grid,
                in_specs=[
                    pl.BlockSpec((tb, dd), lambda i: (i, 0)),    # driver, batch-tiled
                    pl.BlockSpec((tb, kp), lambda i: (i, 0)),    # replicated op, batch-tiled
                    const_spec((dd, ck)),                        # weight  (VMEM-resident)
                    const_spec((1, ck)),                         # bias row (VMEM-resident)
                    const_spec((Cp, ck)),                        # selector (VMEM-resident)
                ],
                out_specs=pl.BlockSpec((Cp, tb), lambda i: (0, i)),   # lane-dense store
            ),
            compiler_params=pltpu.CompilerParams(
                dimension_semantics=("parallel",),
                vmem_limit_bytes=vmem_limit_bytes,
            ),
        )(drv, rep, wmat, brow, selt)
        return jax.block_until_ready(out)

    try:
        out_t = _call(True)
    except Exception:
        # Fall back to default (double) buffering if pipeline_mode=Buffered(1)
        # is not supported by the installed JAX/Mosaic.
        out_t = _call(False)

    res = out_t[:C, :B].T                       # (B, C)
    if C == 1:
        res = res[:, 0]
    return res


def _reference(x, y, weight, bias, class_num):
    B, H = x.shape
    Wy = y @ weight.T + bias                    # (B, C*H)
    Wy = Wy.reshape(B, class_num, H)
    out = jnp.sum(x[:, None, :] * Wy, axis=2)   # (B, C)
    if class_num == 1:
        out = out[:, 0]
    return out


if __name__ == "__main__":
    key = jax.random.PRNGKey(0)
    configs = [
        # (B, x_size, y_size, class_num)
        (8,   32,  48, 3),    # original demo shape, replicate-x order
        (16, 200,  60, 2),    # y much smaller -> swapped (replicate-y) order + folded bias column
        (4,   32,  32, 1),    # class_num == 1 -> squeezed output
        (300, 64,  48, 3),    # multi-step batch grid (2 grid steps, padded tail block)
    ]
    for idx, (B, xs, ys, cn) in enumerate(configs):
        kk = jax.random.fold_in(key, idx)
        kx, ky, kw, kb = jax.random.split(kk, 4)
        x = jax.random.normal(kx, (B, xs), dtype=jnp.float32)
        y = jax.random.normal(ky, (B, ys), dtype=jnp.float32)

        # Deterministic nn.Linear-style init: U(-1/sqrt(y_size), 1/sqrt(y_size)).
        bound = 1.0 / (ys ** 0.5)
        weight = jax.random.uniform(kw, (xs * cn, ys), minval=-bound, maxval=bound,
                                    dtype=jnp.float32)
        bias = jax.random.uniform(kb, (xs * cn,), minval=-bound, maxval=bound,
                                  dtype=jnp.float32)

        out = bilinear_layer(x, y, weight, bias, cn)
        out = jax.block_until_ready(out)
        ref = _reference(x, y, weight, bias, cn)
        assert out.shape == ref.shape, (idx, out.shape, ref.shape)
        assert jnp.allclose(out, ref, atol=2e-4, rtol=2e-4), \
            (idx, float(jnp.max(jnp.abs(out - ref))))

    print("KERNEL_OK")
</pallas_src>

<mosaic_0001>
module attributes {stable_mosaic.version = 11 : i64} {
  func.func @_bilinear_kernel(%arg0: i32, %arg1: memref<8x48xf32, #tpu.memory_space<vmem>>, %arg2: memref<8x128xf32, #tpu.memory_space<vmem>>, %arg3: memref<48x384xf32, #tpu.memory_space<vmem>>, %arg4: memref<1x384xf32, #tpu.memory_space<vmem>>, %arg5: memref<8x384xf32, #tpu.memory_space<vmem>>, %arg6: memref<8x8xf32, #tpu.memory_space<vmem>>) attributes {dimension_semantics = [#tpu.dimension_semantics<parallel>], iteration_bounds = array<i64: 1>, scalar_prefetch = 0 : i64, scratch_operands = 0 : i64, tpu.core_type = #tpu.core_type<tc>, window_params = [{transform_indices = @transform_0, window_bounds = array<i64: 8, 48>}, {transform_indices = @transform_1, window_bounds = array<i64: 8, 128>}, {pipeline_mode = #tpu.pipeline_mode<synchronous>, transform_indices = @transform_2, window_bounds = array<i64: 48, 384>}, {pipeline_mode = #tpu.pipeline_mode<synchronous>, transform_indices = @transform_3, window_bounds = array<i64: 1, 384>}, {pipeline_mode = #tpu.pipeline_mode<synchronous>, transform_indices = @transform_4, window_bounds = array<i64: 8, 384>}, {transform_indices = @transform_5, window_bounds = array<i64: 8, 8>}]} {
    %c0 = arith.constant 0 : index
    %c0_0 = arith.constant 0 : index
    %0 = vector.load %arg1[%c0, %c0_0] : memref<8x48xf32, #tpu.memory_space<vmem>>, vector<8x48xf32>
    %c0_1 = arith.constant 0 : index
    %c0_2 = arith.constant 0 : index
    %1 = vector.load %arg3[%c0_1, %c0_2] : memref<48x384xf32, #tpu.memory_space<vmem>>, vector<48x384xf32>
    %cst = arith.constant dense<0.000000e+00> : vector<8x384xf32>
    %2 = tpu.matmul %0, %1, %cst {dimension_numbers = #tpu.dot_dimension_numbers<[1], [0], [0], [1], [0, 0, 1, 1], [], []>} : vector<8x48xf32>, vector<48x384xf32>, vector<8x384xf32> -> vector<8x384xf32>
    %c0_3 = arith.constant 0 : index
    %c0_4 = arith.constant 0 : index
    %3 = vector.load %arg2[%c0_3, %c0_4] : memref<8x128xf32, #tpu.memory_space<vmem>>, vector<8x128xf32>
    %4 = tpu.concatenate %3, %3, %3 in 1 : vector<8x128xf32>, vector<8x128xf32>, vector<8x128xf32> -> vector<8x384xf32>
    %c0_5 = arith.constant 0 : index
    %c0_6 = arith.constant 0 : index
    %5 = vector.load %arg4[%c0_5, %c0_6] : memref<1x384xf32, #tpu.memory_space<vmem>>, vector<1x384xf32>
    %6 = vector.broadcast %5 : vector<1x384xf32> to vector<8x384xf32>
    %7 = arith.addf %2, %6 : vector<8x384xf32>
    %8 = arith.mulf %4, %7 : vector<8x384xf32>
    %c0_7 = arith.constant 0 : index
    %c0_8 = arith.constant 0 : index
    %9 = vector.load %arg5[%c0_7, %c0_8] : memref<8x384xf32, #tpu.memory_space<vmem>>, vector<8x384xf32>
    %cst_9 = arith.constant dense<0.000000e+00> : vector<8x8xf32>
    %10 = tpu.matmul %9, %8, %cst_9 {dimension_numbers = #tpu.dot_dimension_numbers<[1], [1], [0], [0], [0, 0, 1, 0], [], []>} : vector<8x384xf32>, vector<8x384xf32>, vector<8x8xf32> -> vector<8x8xf32>
    %c0_10 = arith.constant 0 : index
    %c0_11 = arith.constant 0 : index
    %11 = vector.load %arg6[%c0_10, %c0_11] : memref<8x8xf32, #tpu.memory_space<vmem>>, vector<8x8xf32>
    tpu.vector_store %arg6[%c0_10, %c0_11], %10 {strides = array<i32>} : memref<8x8xf32, #tpu.memory_space<vmem>>, vector<8x8xf32>,
    return
  }
  func.func @transform_0(%arg0: i32) -> (i32, i32) {
    %c0_i32 = arith.constant 0 : i32
    %c0_i32_0 = arith.constant 0 : i32
    return %arg0, %c0_i32 : i32, i32
  }
  func.func @transform_1(%arg0: i32) -> (i32, i32) {
    %c0_i32 = arith.constant 0 : i32
    %c0_i32_0 = arith.constant 0 : i32
    return %arg0, %c0_i32 : i32, i32
  }
  func.func @transform_2(%arg0: i32) -> (i32, i32) {
    %c0_i32 = arith.constant 0 : i32
    %c0_i32_0 = arith.constant 0 : i32
    %c0_i32_1 = arith.constant 0 : i32
    return %c0_i32, %c0_i32_0 : i32, i32
  }
  func.func @transform_3(%arg0: i32) -> (i32, i32) {
    %c0_i32 = arith.constant 0 : i32
    %c0_i32_0 = arith.constant 0 : i32
    %c0_i32_1 = arith.constant 0 : i32
    return %c0_i32, %c0_i32_0 : i32, i32
  }
  func.func @transform_4(%arg0: i32) -> (i32, i32) {
    %c0_i32 = arith.constant 0 : i32
    %c0_i32_0 = arith.constant 0 : i32
    %c0_i32_1 = arith.constant 0 : i32
    return %c0_i32, %c0_i32_0 : i32, i32
  }
  func.func @transform_5(%arg0: i32) -> (i32, i32) {
    %c0_i32 = arith.constant 0 : i32
    %c0_i32_0 = arith.constant 0 : i32
    return %c0_i32, %arg0 : i32, i32
  }
}

module attributes {stable_mosaic.version = 11 : i64} {
  func.func @_bilinear_kernel(%arg0: i32, %arg1: memref<8x48xf32, #tpu.memory_space<vmem>>, %arg2: memref<8x128xf32, #tpu.memory_space<vmem>>, %arg3: memref<48x384xf32, #tpu.memory_space<vmem>>, %arg4: memref<1x384xf32, #tpu.memory_space<vmem>>, %arg5: memref<8x384xf32, #tpu.memory_space<vmem>>, %arg6: memref<8x8xf32, #tpu.memory_space<vmem>>) attributes {dimension_semantics = [#tpu.dimension_semantics<parallel>], iteration_bounds = array<i64: 1>, scalar_prefetch = 0 : i64, scratch_operands = 0 : i64, tpu.core_type = #tpu.core_type<tc>, window_params = [{transform_indices = @transform_0, window_bounds = array<i64: 8, 48>}, {transform_indices = @transform_1, window_bounds = array<i64: 8, 128>}, {pipeline_mode = #tpu.pipeline_mode<synchronous>, transform_indices = @transform_2, window_bounds = array<i64: 48, 384>}, {pipeline_mode = #tpu.pipeline_mode<synchronous>, transform_indices = @transform_3, window_bounds = array<i64: 1, 384>}, {pipeline_mode = #tpu.pipeline_mode<synchronous>, transform_indices = @transform_4, window_bounds = array<i64: 8, 384>}, {transform_indices = @transform_5, window_bounds = array<i64: 8, 8>}]} {
    %c0 = arith.constant 0 : index
    %c0_0 = arith.constant 0 : index
    %0 = vector.load %arg1[%c0, %c0_0] : memref<8x48xf32, #tpu.memory_space<vmem>>, vector<8x48xf32>
    %c0_1 = arith.constant 0 : index
    %c0_2 = arith.constant 0 : index
    %1 = vector.load %arg3[%c0_1, %c0_2] : memref<48x384xf32, #tpu.memory_space<vmem>>, vector<48x384xf32>
    %cst = arith.constant dense<0.000000e+00> : vector<8x384xf32>
    %2 = tpu.matmul %0, %1, %cst {dimension_numbers = #tpu.dot_dimension_numbers<[1], [0], [0], [1], [0, 0, 1, 1], [], []>} : vector<8x48xf32>, vector<48x384xf32>, vector<8x384xf32> -> vector<8x384xf32>
    %c0_3 = arith.constant 0 : index
    %c0_4 = arith.constant 0 : index
    %3 = vector.load %arg2[%c0_3, %c0_4] : memref<8x128xf32, #tpu.memory_space<vmem>>, vector<8x128xf32>
    %4 = tpu.concatenate %3, %3, %3 in 1 : vector<8x128xf32>, vector<8x128xf32>, vector<8x128xf32> -> vector<8x384xf32>
    %c0_5 = arith.constant 0 : index
    %c0_6 = arith.constant 0 : index
    %5 = vector.load %arg4[%c0_5, %c0_6] : memref<1x384xf32, #tpu.memory_space<vmem>>, vector<1x384xf32>
    %6 = vector.broadcast %5 : vector<1x384xf32> to vector<8x384xf32>
    %7 = arith.addf %2, %6 : vector<8x384xf32>
    %8 = arith.mulf %4, %7 : vector<8x384xf32>
    %c0_7 = arith.constant 0 : index
    %c0_8 = arith.constant 0 : index
    %9 = vector.load %arg5[%c0_7, %c0_8] : memref<8x384xf32, #tpu.memory_space<vmem>>, vector<8x384xf32>
    %cst_9 = arith.constant dense<0.000000e+00> : vector<8x8xf32>
    %10 = tpu.matmul %9, %8, %cst_9 {dimension_numbers = #tpu.dot_dimension_numbers<[1], [1], [0], [0], [0, 0, 1, 0], [], []>} : vector<8x384xf32>, vector<8x384xf32>, vector<8x8xf32> -> vector<8x8xf32>
    %c0_10 = arith.constant 0 : index
    %c0_11 = arith.constant 0 : index
    %11 = vector.load %arg6[%c0_10, %c0_11] : memref<8x8xf32, #tpu.memory_space<vmem>>, vector<8x8xf32>
    tpu.vector_store %arg6[%c0_10, %c0_11], %10 {strides = array<i32>} : memref<8x8xf32, #tpu.memory_space<vmem>>, vector<8x8xf32>,
    return
  }
  func.func @transform_0(%arg0: i32) -> (i32, i32) {
    %c0_i32 = arith.constant 0 : i32
    %c0_i32_0 = arith.constant 0 : i32
    return %arg0, %c0_i32 : i32, i32
  }
  func.func @transform_1(%arg0: i32) -> (i32, i32) {
    %c0_i32 = arith.constant 0 : i32
    %c0_i32_0 = arith.constant 0 : i32
    return %arg0, %c0_i32 : i32, i32
  }
  func.func @transform_2(%arg0: i32) -> (i32, i32) {
    %c0_i32 = arith.constant 0 : i32
    %c0_i32_0 = arith.constant 0 : i32
    %c0_i32_1 = arith.constant 0 : i32
    return %c0_i32, %c0_i32_0 : i32, i32
  }
  func.func @transform_3(%arg0: i32) -> (i32, i32) {
    %c0_i32 = arith.constant 0 : i32
    %c0_i32_0 = arith.constant 0 : i32
    %c0_i32_1 = arith.constant 0 : i32
    return %c0_i32, %c0_i32_0 : i32, i32
  }
  func.func @transform_4(%arg0: i32) -> (i32, i32) {
    %c0_i32 = arith.constant 0 : i32
    %c0_i32_0 = arith.constant 0 : i32
    %c0_i32_1 = arith.constant 0 : i32
    return %c0_i32, %c0_i32_0 : i32, i32
  }
  func.func @transform_5(%arg0: i32) -> (i32, i32) {
    %c0_i32 = arith.constant 0 : i32
    %c0_i32_0 = arith.constant 0 : i32
    return %c0_i32, %arg0 : i32, i32
  }
}

</mosaic_0001>

<llo_original>
// kernel: tpu_custom_call.1
$region0: #{tpu_custom_call.1}
  #allocation0 [shape = 'u32[]', space=smem, size = 0x4, offset = 0x4, fixed_abs, tag = 'smem constant byte address 0x4 - core index']
  #allocation1 [shape = 'u32[72,128]{1,0:T(1,128)}', space=vmem, size = 0x9000, scoped, tag = 'internal scratch']
  %s0 = inlined_call_operand.hbm [shape: f32[8,48], index: 0, kind: input, shape index: {}]
  %s1 = inlined_call_operand.hbm [shape: f32[8,128], index: 1, kind: input, shape index: {}]
  %s2 = inlined_call_operand.hbm [shape: f32[48,384], index: 2, kind: input, shape index: {}]
  %s3 = inlined_call_operand.hbm [shape: f32[1,384], index: 3, kind: input, shape index: {}]
  %s4 = inlined_call_operand.hbm [shape: f32[8,384], index: 4, kind: input, shape index: {}]
  %s5 = inlined_call_operand.hbm [shape: f32[8,8], index: 5, kind: output, shape index: {}]
  %s6 = sld [smem:[#allocation0]]
  $region50: #{tpu_custom_call.1} parent=0
    _
  %s8 = ssub.s32 1, %s6
  %s9 = scalar_select 0, %s8, %s6
  $region1: #{tpu_custom_call.1} parent=0
    #allocation2 [shape = 'u8[4096]{0}', space=vmem, size = 0x1000, scoped, tag = 'input window, operand 0, single buffered']
    #allocation3 [shape = 's32[1]{0}', space=sflag, size = 0x4, scoped, tag = 'scoped memory for tpu_custom_call.1']
    #allocation4 [shape = 's32[1]{0}', space=sflag, size = 0x4, scoped, tag = 'scoped memory for tpu_custom_call.1']
    #allocation5 [shape = 'u8[4096]{0}', space=vmem, size = 0x1000, scoped, tag = 'input window, operand 1, single buffered']
    #allocation6 [shape = 's32[1]{0}', space=sflag, size = 0x4, scoped, tag = 'scoped memory for tpu_custom_call.1']
    #allocation7 [shape = 'u8[73728]{0}', space=vmem, size = 0x12000, scoped, tag = 'input window, operand 2, single buffered']
    #allocation8 [shape = 'u8[1536]{0}', space=vmem, size = 0x800, scoped, tag = 'input window, operand 3, single buffered']
    #allocation9 [shape = 's32[1]{0}', space=sflag, size = 0x4, scoped, tag = 'scoped memory for tpu_custom_call.1']
    #allocation10 [shape = 'u8[12288]{0}', space=vmem, size = 0x3000, scoped, tag = 'input window, operand 4, single buffered']
    #allocation11 [shape = 'u8[4096]{0}', space=vmem, size = 0x1000, scoped, tag = 'output window, operand 0, single buffered']
    %10 = vsyncpa [#allocation3], 0
    %11 = vsyncpa [#allocation6], 0
    %12 = vsyncpa [#allocation9], 0
    %13 = vsyncpa [#allocation4], 0
    // Predicated region
    $region2: #{tpu_custom_call.1} parent=1 // pred_check
      _
    $region3: #{tpu_custom_call.1} parent=1 // pred_check_branch
      %15 = sbr.rel (0) target = $region5
    $region4: #{tpu_custom_call.1} parent=1 // pred_region
      %17 = vsyncadd [#allocation3], 0
      %s19 = sshll.u32 %s0, 4
      %s20 = int_to_ptr.hbm [resolvable:$true] %s19
      %s21 = sshll.u32 [#allocation2], 4
      %s22 = int_to_ptr.vmem [resolvable:$true] %s21
      %24 = dma.hbm_to_vmem [thread:$0]  %s20, 128, %s22, [#allocation3]
    $region5: #{tpu_custom_call.1} parent=1 // pred_fallthru
      _
    // Predicated region
    $region6: #{tpu_custom_call.1} parent=1 // pred_check
      _
    $region7: #{tpu_custom_call.1} parent=1 // pred_check_branch
      %26 = sbr.rel (0) target = $region9
    $region8: #{tpu_custom_call.1} parent=1 // pred_region
      %28 = vsyncadd [#allocation6], 0
      %s30 = sshll.u32 %s1, 4
      %s31 = int_to_ptr.hbm [resolvable:$true] %s30
      %s32 = sshll.u32 [#allocation5], 4
      %s33 = int_to_ptr.vmem [resolvable:$true] %s32
      %35 = dma.hbm_to_vmem [thread:$0]  %s31, 128, %s33, [#allocation6]
    $region9: #{tpu_custom_call.1} parent=1 // pred_fallthru
      _
    // Predicated region
    $region10: #{tpu_custom_call.1} parent=1 // pred_check
      _
    $region11: #{tpu_custom_call.1} parent=1 // pred_check_branch
      %37 = sbr.rel (0) target = $region13
    $region12: #{tpu_custom_call.1} parent=1 // pred_region
      %39 = vsyncadd [#allocation6], 0
      %s40 = sshll.u32 %s2, 4
      %s41 = int_to_ptr.hbm [resolvable:$true] %s40
      %s42 = sshll.u32 [#allocation7], 4
      %s43 = int_to_ptr.vmem [resolvable:$true] %s42
      %48 = dma.hbm_to_vmem [thread:$0]  %s41, 2304, %s43, [#allocation6], 384, 384, 24
    $region13: #{tpu_custom_call.1} parent=1 // pred_fallthru
      _
    // Predicated region
    $region14: #{tpu_custom_call.1} parent=1 // pred_check
      _
    $region15: #{tpu_custom_call.1} parent=1 // pred_check_branch
      %50 = sbr.rel (0) target = $region17
    $region16: #{tpu_custom_call.1} parent=1 // pred_region
      %52 = vsyncadd [#allocation9], 0
      %s54 = sshll.u32 %s3, 4
      %s55 = int_to_ptr.hbm [resolvable:$true] %s54
      %s56 = sshll.u32 [#allocation8], 4
      %s57 = int_to_ptr.vmem [resolvable:$true] %s56
      %59 = dma.hbm_to_vmem [thread:$0]  %s55, 48, %s57, [#allocation9]
    $region17: #{tpu_custom_call.1} parent=1 // pred_fallthru
      _
    // Predicated region
    $region18: #{tpu_custom_call.1} parent=1 // pred_check
      _
    $region19: #{tpu_custom_call.1} parent=1 // pred_check_branch
      %61 = sbr.rel (0) target = $region21
    $region20: #{tpu_custom_call.1} parent=1 // pred_region
      %63 = vsyncadd [#allocation9], 0
      %s65 = sshll.u32 %s4, 4
      %s66 = int_to_ptr.hbm [resolvable:$true] %s65
      %s67 = sshll.u32 [#allocation10], 4
      %s68 = int_to_ptr.vmem [resolvable:$true] %s67
      %70 = dma.hbm_to_vmem [thread:$0]  %s66, 384, %s68, [#allocation9]
    $region21: #{tpu_custom_call.1} parent=1 // pred_fallthru
      _
    // Predicated region
    $region22: #{tpu_custom_call.1} parent=1 // pred_check
      _
    $region23: #{tpu_custom_call.1} parent=1 // pred_check_branch
      %72 = sbr.rel (0) target = $region25
    $region24: #{tpu_custom_call.1} parent=1 // pred_region
      %74 = dma.done [#allocation3], 128
    $region25: #{tpu_custom_call.1} parent=1 // pred_fallthru
      _
    // Predicated region
    $region26: #{tpu_custom_call.1} parent=1 // pred_check
      _
    $region27: #{tpu_custom_call.1} parent=1 // pred_check_branch
      %76 = sbr.rel (0) target = $region29
    $region28: #{tpu_custom_call.1} parent=1 // pred_region
      %78 = dma.done [#allocation6], 128
    $region29: #{tpu_custom_call.1} parent=1 // pred_fallthru
      _
    // Predicated region
    $region30: #{tpu_custom_call.1} parent=1 // pred_check
      _
    $region31: #{tpu_custom_call.1} parent=1 // pred_check_branch
      %80 = sbr.rel (0) target = $region33
    $region32: #{tpu_custom_call.1} parent=1 // pred_region
      %82 = dma.done [#allocation6], 2304
    $region33: #{tpu_custom_call.1} parent=1 // pred_fallthru
      _
    // Predicated region
    $region34: #{tpu_custom_call.1} parent=1 // pred_check
      _
    $region35: #{tpu_custom_call.1} parent=1 // pred_check_branch
      %84 = sbr.rel (0) target = $region37
    $region36: #{tpu_custom_call.1} parent=1 // pred_region
      %86 = dma.done [#allocation9], 48
    $region37: #{tpu_custom_call.1} parent=1 // pred_fallthru
      _
    // Predicated region
    $region38: #{tpu_custom_call.1} parent=1 // pred_check
      _
    $region39: #{tpu_custom_call.1} parent=1 // pred_check_branch
      %88 = sbr.rel (0) target = $region41
    $region40: #{tpu_custom_call.1} parent=1 // pred_region
      %90 = dma.done [#allocation9], 384
    $region41: #{tpu_custom_call.1} parent=1 // pred_fallthru
      _
    %v91 = vld [vmem:[#allocation2] sm:$0xff]
    %v92 = vld [vmem:[#allocation7] sm:$0xff]
    %v93 = vld [vmem:[#allocation7 + $0x8] sm:$0xff]
    %v94 = vld [vmem:[#allocation7 + $0x10] sm:$0xff]
    %v95 = vld [vmem:[#allocation7 + $0x18] sm:$0xff]
    %v96 = vld [vmem:[#allocation7 + $0x20] sm:$0xff]
    %v97 = vld [vmem:[#allocation7 + $0x28] sm:$0xff]
    %v98 = vld [vmem:[#allocation7 + $0x30] sm:$0xff]
    %v99 = vld [vmem:[#allocation7 + $0x38] sm:$0xff]
    %v100 = vld [vmem:[#allocation7 + $0x40] sm:$0xff]
    %v101 = vld [vmem:[#allocation7 + $0x48] sm:$0xff]
    %v102 = vld [vmem:[#allocation7 + $0x50] sm:$0xff]
    %v103 = vld [vmem:[#allocation7 + $0x58] sm:$0xff]
    %v104 = vld [vmem:[#allocation7 + $0x60] sm:$0xff]
    %v105 = vld [vmem:[#allocation7 + $0x68] sm:$0xff]
    %v106 = vld [vmem:[#allocation7 + $0x70] sm:$0xff]
    %v107 = vld [vmem:[#allocation7 + $0x78] sm:$0xff]
    %v108 = vld [vmem:[#allocation7 + $0x80] sm:$0xff]
    %v109 = vld [vmem:[#allocation7 + $0x88] sm:$0xff]
    %v110 = vld [vmem:[#allocation5] sm:$0xff]
    %v111 = vld [vmem:[#allocation8] sm:$0x7]
    %v113 = vperm.slane %v111, 0
    %v114 = vperm.slane %v111, 1
    %v115 = vperm.slane %v111, 2
    %vm119 = vcmask 392192
    %v121 = vsel %vm119, %v91, 0
    %123 = vmatpush.msra.mxu0 0.0
    %124 = vmatpush.msra.mxu0 0.0
    %125 = vmatpush.msra.mxu0 0.0
    %126 = vmatpush.msra.mxu0 0.0
    %127 = vmatpush.msra.mxu0 0.0
    %128 = vmatpush.msra.mxu0 0.0
    %129 = vmatpush.msra.mxu0 0.0
    %130 = vmatpush.msra.mxu0 0.0
    %131 = vmatpush.msra.mxu0 0.0
    %132 = vmatpush.msra.mxu0 0.0
    %133 = vmatpush.msra.mxu0 %v107
    %134 = vmatpush.msra.mxu0 %v104
    %135 = vmatpush.msra.mxu0 %v101
    %136 = vmatpush.msra.mxu0 %v98
    %137 = vmatpush.msra.mxu0 %v95
    %138 = vmatpush.msra.mxu0 %v92
    %139 = vmatmul.f32.gmra.mxu0 %v121
    %v140 = vpop.f32.mrf.mxu0
    %v141 = vadd.f32 %v113, %v140
    %142 = vdwg.mxu0
    %143 = vmatpush.msra.mxu0 0.0
    %144 = vmatpush.msra.mxu0 0.0
    %145 = vmatpush.msra.mxu0 0.0
    %146 = vmatpush.msra.mxu0 0.0
    %147 = vmatpush.msra.mxu0 0.0
    %148 = vmatpush.msra.mxu0 0.0
    %149 = vmatpush.msra.mxu0 0.0
    %150 = vmatpush.msra.mxu0 0.0
    %151 = vmatpush.msra.mxu0 0.0
    %152 = vmatpush.msra.mxu0 0.0
    %153 = vmatpush.msra.mxu0 %v108
    %154 = vmatpush.msra.mxu0 %v105
    %155 = vmatpush.msra.mxu0 %v102
    %156 = vmatpush.msra.mxu0 %v99
    %157 = vmatpush.msra.mxu0 %v96
    %158 = vmatpush.msra.mxu0 %v93
    %159 = vmatmul.f32.gmra.mxu0 %v121
    %v160 = vpop.f32.mrf.mxu0
    %v161 = vadd.f32 %v114, %v160
    %162 = vdwg.mxu0
    %163 = vmatpush.msra.mxu0 0.0
    %164 = vmatpush.msra.mxu0 0.0
    %165 = vmatpush.msra.mxu0 0.0
    %166 = vmatpush.msra.mxu0 0.0
    %167 = vmatpush.msra.mxu0 0.0
    %168 = vmatpush.msra.mxu0 0.0
    %169 = vmatpush.msra.mxu0 0.0
    %170 = vmatpush.msra.mxu0 0.0
    %171 = vmatpush.msra.mxu0 0.0
    %172 = vmatpush.msra.mxu0 0.0
    %173 = vmatpush.msra.mxu0 %v109
    %174 = vmatpush.msra.mxu0 %v106
    %175 = vmatpush.msra.mxu0 %v103
    %176 = vmatpush.msra.mxu0 %v100
    %177 = vmatpush.msra.mxu0 %v97
    %178 = vmatpush.msra.mxu0 %v94
    %179 = vmatmul.f32.gmra.mxu0 %v121
    %v180 = vpop.f32.mrf.mxu0
    %v181 = vadd.f32 %v115, %v180
    %182 = vdwg.mxu0
    %v183 = vmul.f32 %v110, %v141
    %v184 = vmul.f32 %v110, %v161
    %v185 = vmul.f32 %v110, %v181
    %v186 = vld [vmem:[#allocation10] sm:$0xff]
    %v187 = vld [vmem:[#allocation10 + $0x8] sm:$0xff]
    %v188 = vld [vmem:[#allocation10 + $0x10] sm:$0xff]
    %189 = vmatpush.xpose.msra.mxu0 0.0
    %190 = vmatpush.xpose.msra.mxu0 0.0
    %191 = vmatpush.xpose.msra.mxu0 0.0
    %192 = vmatpush.xpose.msra.mxu0 0.0
    %193 = vmatpush.xpose.msra.mxu0 0.0
    %194 = vmatpush.xpose.msra.mxu0 0.0
    %195 = vmatpush.xpose.msra.mxu0 0.0
    %196 = vmatpush.xpose.msra.mxu0 0.0
    %197 = vmatpush.xpose.msra.mxu0 0.0
    %198 = vmatpush.xpose.msra.mxu0 0.0
    %199 = vmatpush.xpose.msra.mxu0 0.0
    %200 = vmatpush.xpose.msra.mxu0 0.0
    %201 = vmatpush.xpose.msra.mxu0 0.0
    %202 = vmatpush.xpose.msra.mxu0 0.0
    %203 = vmatpush.xpose.msra.mxu0 0.0
    %204 = vmatpush.xpose.msra.mxu0 %v183
    %205 = vmatmul.f32.gmra.mxu0 %v186
    %v206 = vpop.f32.mrf.mxu0
    %v207 = vadd.f32 0.0, %v206
    %208 = vdwg.mxu0
    %209 = vmatpush.xpose.msra.mxu0 0.0
    %210 = vmatpush.xpose.msra.mxu0 0.0
    %211 = vmatpush.xpose.msra.mxu0 0.0
    %212 = vmatpush.xpose.msra.mxu0 0.0
    %213 = vmatpush.xpose.msra.mxu0 0.0
    %214 = vmatpush.xpose.msra.mxu0 0.0
    %215 = vmatpush.xpose.msra.mxu0 0.0
    %216 = vmatpush.xpose.msra.mxu0 0.0
    %217 = vmatpush.xpose.msra.mxu0 0.0
    %218 = vmatpush.xpose.msra.mxu0 0.0
    %219 = vmatpush.xpose.msra.mxu0 0.0
    %220 = vmatpush.xpose.msra.mxu0 0.0
    %221 = vmatpush.xpose.msra.mxu0 0.0
    %222 = vmatpush.xpose.msra.mxu0 0.0
    %223 = vmatpush.xpose.msra.mxu0 0.0
    %224 = vmatpush.xpose.msra.mxu0 %v184
    %225 = vmatmul.f32.gmra.mxu0 %v187
    %v226 = vpop.f32.mrf.mxu0
    %v227 = vadd.f32 %v207, %v226
    %228 = vdwg.mxu0
    %229 = vmatpush.xpose.msra.mxu0 0.0
    %230 = vmatpush.xpose.msra.mxu0 0.0
    %231 = vmatpush.xpose.msra.mxu0 0.0
    %232 = vmatpush.xpose.msra.mxu0 0.0
    %233 = vmatpush.xpose.msra.mxu0 0.0
    %234 = vmatpush.xpose.msra.mxu0 0.0
    %235 = vmatpush.xpose.msra.mxu0 0.0
    %236 = vmatpush.xpose.msra.mxu0 0.0
    %237 = vmatpush.xpose.msra.mxu0 0.0
    %238 = vmatpush.xpose.msra.mxu0 0.0
    %239 = vmatpush.xpose.msra.mxu0 0.0
    %240 = vmatpush.xpose.msra.mxu0 0.0
    %241 = vmatpush.xpose.msra.mxu0 0.0
    %242 = vmatpush.xpose.msra.mxu0 0.0
    %243 = vmatpush.xpose.msra.mxu0 0.0
    %244 = vmatpush.xpose.msra.mxu0 %v185
    %245 = vmatmul.f32.gmra.mxu0 %v188
    %v246 = vpop.f32.mrf.mxu0
    %v247 = vadd.f32 %v227, %v246
    %248 = vdwg.mxu0
    %vm249 = vcmask 64512
    %250 = vst.msk [vmem:[#allocation11] sm:$0xff] %vm249, %v247
    // Predicated region
    $region42: #{tpu_custom_call.1} parent=1 // pred_check
      _
    $region43: #{tpu_custom_call.1} parent=1 // pred_check_branch
      %252 = sbr.rel (0) target = $region45
    $region44: #{tpu_custom_call.1} parent=1 // pred_region
      %254 = vsyncadd [#allocation4], 0
      %s256 = sshll.u32 [#allocation11], 4
      %s257 = int_to_ptr.vmem [resolvable:$true] %s256
      %s258 = sshll.u32 %s5, 4
      %s259 = int_to_ptr.hbm [resolvable:$true] %s258
      %261 = dma.vmem_to_hbm [thread:$0]  %s257, 128, %s259, [#allocation4]
    $region45: #{tpu_custom_call.1} parent=1 // pred_fallthru
      _
    // Predicated region
    $region46: #{tpu_custom_call.1} parent=1 // pred_check
      _
    $region47: #{tpu_custom_call.1} parent=1 // pred_check_branch
      %263 = sbr.rel (0) target = $region49
    $region48: #{tpu_custom_call.1} parent=1 // pred_region
      %265 = dma.done [#allocation4], 128
    $region49: #{tpu_custom_call.1} parent=1 // pred_fallthru
      _
    %266 = vsyncpa [#allocation3], 1
    %267 = vsyncpa [#allocation6], 1
    %268 = vsyncpa [#allocation9], 1
    %269 = vsyncpa [#allocation4], 1

// kernel: tpu_custom_call.1
$region0: #{tpu_custom_call.1}
  #allocation0 [shape = 'u32[]', space=smem, size = 0x4, offset = 0x4, fixed_abs, tag = 'smem constant byte address 0x4 - core index']
  #allocation1 [shape = 'u32[72,128]{1,0:T(1,128)}', space=vmem, size = 0x9000, scoped, tag = 'internal scratch']
  %s0 = inlined_call_operand.hbm [shape: f32[8,48], index: 0, kind: input, shape index: {}]
  %s1 = inlined_call_operand.hbm [shape: f32[8,128], index: 1, kind: input, shape index: {}]
  %s2 = inlined_call_operand.hbm [shape: f32[48,384], index: 2, kind: input, shape index: {}]
  %s3 = inlined_call_operand.hbm [shape: f32[1,384], index: 3, kind: input, shape index: {}]
  %s4 = inlined_call_operand.hbm [shape: f32[8,384], index: 4, kind: input, shape index: {}]
  %s5 = inlined_call_operand.hbm [shape: f32[8,8], index: 5, kind: output, shape index: {}]
  %s6 = sld [smem:[#allocation0]]
  $region50: #{tpu_custom_call.1} parent=0
    _
  %s8 = ssub.s32 1, %s6
  %s9 = scalar_select 0, %s8, %s6
  $region1: #{tpu_custom_call.1} parent=0
    #allocation2 [shape = 'u8[4096]{0}', space=vmem, size = 0x1000, scoped, tag = 'input window, operand 0, single buffered']
    #allocation3 [shape = 's32[1]{0}', space=sflag, size = 0x4, scoped, tag = 'scoped memory for tpu_custom_call.1']
    #allocation4 [shape = 's32[1]{0}', space=sflag, size = 0x4, scoped, tag = 'scoped memory for tpu_custom_call.1']
    #allocation5 [shape = 'u8[4096]{0}', space=vmem, size = 0x1000, scoped, tag = 'input window, operand 1, single buffered']
    #allocation6 [shape = 's32[1]{0}', space=sflag, size = 0x4, scoped, tag = 'scoped memory for tpu_custom_call.1']
    #allocation7 [shape = 'u8[73728]{0}', space=vmem, size = 0x12000, scoped, tag = 'input window, operand 2, single buffered']
    #allocation8 [shape = 'u8[1536]{0}', space=vmem, size = 0x800, scoped, tag = 'input window, operand 3, single buffered']
    #allocation9 [shape = 's32[1]{0}', space=sflag, size = 0x4, scoped, tag = 'scoped memory for tpu_custom_call.1']
    #allocation10 [shape = 'u8[12288]{0}', space=vmem, size = 0x3000, scoped, tag = 'input window, operand 4, single buffered']
    #allocation11 [shape = 'u8[4096]{0}', space=vmem, size = 0x1000, scoped, tag = 'output window, operand 0, single buffered']
    %10 = vsyncpa [#allocation3], 0
    %11 = vsyncpa [#allocation6], 0
    %12 = vsyncpa [#allocation9], 0
    %13 = vsyncpa [#allocation4], 0
    // Predicated region
    $region2: #{tpu_custom_call.1} parent=1 // pred_check
      _
    $region3: #{tpu_custom_call.1} parent=1 // pred_check_branch
      %15 = sbr.rel (0) target = $region5
    $region4: #{tpu_custom_call.1} parent=1 // pred_region
      %17 = vsyncadd [#allocation3], 0
      %s19 = sshll.u32 %s0, 4
      %s20 = int_to_ptr.hbm [resolvable:$true] %s19
      %s21 = sshll.u32 [#allocation2], 4
      %s22 = int_to_ptr.vmem [resolvable:$true] %s21
      %24 = dma.hbm_to_vmem [thread:$0]  %s20, 128, %s22, [#allocation3]
    $region5: #{tpu_custom_call.1} parent=1 // pred_fallthru
      _
    // Predicated region
    $region6: #{tpu_custom_call.1} parent=1 // pred_check
      _
    $region7: #{tpu_custom_call.1} parent=1 // pred_check_branch
      %26 = sbr.rel (0) target = $region9
    $region8: #{tpu_custom_call.1} parent=1 // pred_region
      %28 = vsyncadd [#allocation6], 0
      %s30 = sshll.u32 %s1, 4
      %s31 = int_to_ptr.hbm [resolvable:$true] %s30
      %s32 = sshll.u32 [#allocation5], 4
      %s33 = int_to_ptr.vmem [resolvable:$true] %s32
      %35 = dma.hbm_to_vmem [thread:$0]  %s31, 128, %s33, [#allocation6]
    $region9: #{tpu_custom_call.1} parent=1 // pred_fallthru
      _
    // Predicated region
    $region10: #{tpu_custom_call.1} parent=1 // pred_check
      _
    $region11: #{tpu_custom_call.1} parent=1 // pred_check_branch
      %37 = sbr.rel (0) target = $region13
    $region12: #{tpu_custom_call.1} parent=1 // pred_region
      %39 = vsyncadd [#allocation6], 0
      %s40 = sshll.u32 %s2, 4
      %s41 = int_to_ptr.hbm [resolvable:$true] %s40
      %s42 = sshll.u32 [#allocation7], 4
      %s43 = int_to_ptr.vmem [resolvable:$true] %s42
      %48 = dma.hbm_to_vmem [thread:$0]  %s41, 2304, %s43, [#allocation6], 384, 384, 24
    $region13: #{tpu_custom_call.1} parent=1 // pred_fallthru
      _
    // Predicated region
    $region14: #{tpu_custom_call.1} parent=1 // pred_check
      _
    $region15: #{tpu_custom_call.1} parent=1 // pred_check_branch
      %50 = sbr.rel (0) target = $region17
    $region16: #{tpu_custom_call.1} parent=1 // pred_region
      %52 = vsyncadd [#allocation9], 0
      %s54 = sshll.u32 %s3, 4
      %s55 = int_to_ptr.hbm [resolvable:$true] %s54
      %s56 = sshll.u32 [#allocation8], 4
      %s57 = int_to_ptr.vmem [resolvable:$true] %s56
      %59 = dma.hbm_to_vmem [thread:$0]  %s55, 48, %s57, [#allocation9]
    $region17: #{tpu_custom_call.1} parent=1 // pred_fallthru
      _
    // Predicated region
    $region18: #{tpu_custom_call.1} parent=1 // pred_check
      _
    $region19: #{tpu_custom_call.1} parent=1 // pred_check_branch
      %61 = sbr.rel (0) target = $region21
    $region20: #{tpu_custom_call.1} parent=1 // pred_region
      %63 = vsyncadd [#allocation9], 0
      %s65 = sshll.u32 %s4, 4
      %s66 = int_to_ptr.hbm [resolvable:$true] %s65
      %s67 = sshll.u32 [#allocation10], 4
      %s68 = int_to_ptr.vmem [resolvable:$true] %s67
      %70 = dma.hbm_to_vmem [thread:$0]  %s66, 384, %s68, [#allocation9]
    $region21: #{tpu_custom_call.1} parent=1 // pred_fallthru
      _
    // Predicated region
    $region22: #{tpu_custom_call.1} parent=1 // pred_check
      _
    $region23: #{tpu_custom_call.1} parent=1 // pred_check_branch
      %72 = sbr.rel (0) target = $region25
    $region24: #{tpu_custom_call.1} parent=1 // pred_region
      %74 = dma.done [#allocation3], 128
    $region25: #{tpu_custom_call.1} parent=1 // pred_fallthru
      _
    // Predicated region
    $region26: #{tpu_custom_call.1} parent=1 // pred_check
      _
    $region27: #{tpu_custom_call.1} parent=1 // pred_check_branch
      %76 = sbr.rel (0) target = $region29
    $region28: #{tpu_custom_call.1} parent=1 // pred_region
      %78 = dma.done [#allocation6], 128
    $region29: #{tpu_custom_call.1} parent=1 // pred_fallthru
      _
    // Predicated region
    $region30: #{tpu_custom_call.1} parent=1 // pred_check
      _
    $region31: #{tpu_custom_call.1} parent=1 // pred_check_branch
      %80 = sbr.rel (0) target = $region33
    $region32: #{tpu_custom_call.1} parent=1 // pred_region
      %82 = dma.done [#allocation6], 2304
    $region33: #{tpu_custom_call.1} parent=1 // pred_fallthru
      _
    // Predicated region
    $region34: #{tpu_custom_call.1} parent=1 // pred_check
      _
    $region35: #{tpu_custom_call.1} parent=1 // pred_check_branch
      %84 = sbr.rel (0) target = $region37
    $region36: #{tpu_custom_call.1} parent=1 // pred_region
      %86 = dma.done [#allocation9], 48
    $region37: #{tpu_custom_call.1} parent=1 // pred_fallthru
      _
    // Predicated region
    $region38: #{tpu_custom_call.1} parent=1 // pred_check
      _
    $region39: #{tpu_custom_call.1} parent=1 // pred_check_branch
      %88 = sbr.rel (0) target = $region41
    $region40: #{tpu_custom_call.1} parent=1 // pred_region
      %90 = dma.done [#allocation9], 384
    $region41: #{tpu_custom_call.1} parent=1 // pred_fallthru
      _
    %v91 = vld [vmem:[#allocation2] sm:$0xff]
    %v92 = vld [vmem:[#allocation7] sm:$0xff]
    %v93 = vld [vmem:[#allocation7 + $0x8] sm:$0xff]
    %v94 = vld [vmem:[#allocation7 + $0x10] sm:$0xff]
    %v95 = vld [vmem:[#allocation7 + $0x18] sm:$0xff]
    %v96 = vld [vmem:[#allocation7 + $0x20] sm:$0xff]
    %v97 = vld [vmem:[#allocation7 + $0x28] sm:$0xff]
    %v98 = vld [vmem:[#allocation7 + $0x30] sm:$0xff]
    %v99 = vld [vmem:[#allocation7 + $0x38] sm:$0xff]
    %v100 = vld [vmem:[#allocation7 + $0x40] sm:$0xff]
    %v101 = vld [vmem:[#allocation7 + $0x48] sm:$0xff]
    %v102 = vld [vmem:[#allocation7 + $0x50] sm:$0xff]
    %v103 = vld [vmem:[#allocation7 + $0x58] sm:$0xff]
    %v104 = vld [vmem:[#allocation7 + $0x60] sm:$0xff]
    %v105 = vld [vmem:[#allocation7 + $0x68] sm:$0xff]
    %v106 = vld [vmem:[#allocation7 + $0x70] sm:$0xff]
    %v107 = vld [vmem:[#allocation7 + $0x78] sm:$0xff]
    %v108 = vld [vmem:[#allocation7 + $0x80] sm:$0xff]
    %v109 = vld [vmem:[#allocation7 + $0x88] sm:$0xff]
    %v110 = vld [vmem:[#allocation5] sm:$0xff]
    %v111 = vld [vmem:[#allocation8] sm:$0x7]
    %v113 = vperm.slane %v111, 0
    %v114 = vperm.slane %v111, 1
    %v115 = vperm.slane %v111, 2
    %vm119 = vcmask 392192
    %v121 = vsel %vm119, %v91, 0
    %123 = vmatpush.msra.mxu0 0.0
    %124 = vmatpush.msra.mxu0 0.0
    %125 = vmatpush.msra.mxu0 0.0
    %126 = vmatpush.msra.mxu0 0.0
    %127 = vmatpush.msra.mxu0 0.0
    %128 = vmatpush.msra.mxu0 0.0
    %129 = vmatpush.msra.mxu0 0.0
    %130 = vmatpush.msra.mxu0 0.0
    %131 = vmatpush.msra.mxu0 0.0
    %132 = vmatpush.msra.mxu0 0.0
    %133 = vmatpush.msra.mxu0 %v107
    %134 = vmatpush.msra.mxu0 %v104
    %135 = vmatpush.msra.mxu0 %v101
    %136 = vmatpush.msra.mxu0 %v98
    %137 = vmatpush.msra.mxu0 %v95
    %138 = vmatpush.msra.mxu0 %v92
    %139 = vmatmul.f32.gmra.mxu0 %v121
    %v140 = vpop.f32.mrf.mxu0
    %v141 = vadd.f32 %v113, %v140
    %142 = vdwg.mxu0
    %143 = vmatpush.msra.mxu0 0.0
    %144 = vmatpush.msra.mxu0 0.0
    %145 = vmatpush.msra.mxu0 0.0
    %146 = vmatpush.msra.mxu0 0.0
    %147 = vmatpush.msra.mxu0 0.0
    %148 = vmatpush.msra.mxu0 0.0
    %149 = vmatpush.msra.mxu0 0.0
    %150 = vmatpush.msra.mxu0 0.0
    %151 = vmatpush.msra.mxu0 0.0
    %152 = vmatpush.msra.mxu0 0.0
    %153 = vmatpush.msra.mxu0 %v108
    %154 = vmatpush.msra.mxu0 %v105
    %155 = vmatpush.msra.mxu0 %v102
    %156 = vmatpush.msra.mxu0 %v99
    %157 = vmatpush.msra.mxu0 %v96
    %158 = vmatpush.msra.mxu0 %v93
    %159 = vmatmul.f32.gmra.mxu0 %v121
    %v160 = vpop.f32.mrf.mxu0
    %v161 = vadd.f32 %v114, %v160
    %162 = vdwg.mxu0
    %163 = vmatpush.msra.mxu0 0.0
    %164 = vmatpush.msra.mxu0 0.0
    %165 = vmatpush.msra.mxu0 0.0
    %166 = vmatpush.msra.mxu0 0.0
    %167 = vmatpush.msra.mxu0 0.0
    %168 = vmatpush.msra.mxu0 0.0
    %169 = vmatpush.msra.mxu0 0.0
    %170 = vmatpush.msra.mxu0 0.0
    %171 = vmatpush.msra.mxu0 0.0
    %172 = vmatpush.msra.mxu0 0.0
    %173 = vmatpush.msra.mxu0 %v109
    %174 = vmatpush.msra.mxu0 %v106
    %175 = vmatpush.msra.mxu0 %v103
    %176 = vmatpush.msra.mxu0 %v100
    %177 = vmatpush.msra.mxu0 %v97
    %178 = vmatpush.msra.mxu0 %v94
    %179 = vmatmul.f32.gmra.mxu0 %v121
    %v180 = vpop.f32.mrf.mxu0
    %v181 = vadd.f32 %v115, %v180
    %182 = vdwg.mxu0
    %v183 = vmul.f32 %v110, %v141
    %v184 = vmul.f32 %v110, %v161
    %v185 = vmul.f32 %v110, %v181
    %v186 = vld [vmem:[#allocation10] sm:$0xff]
    %v187 = vld [vmem:[#allocation10 + $0x8] sm:$0xff]
    %v188 = vld [vmem:[#allocation10 + $0x10] sm:$0xff]
    %189 = vmatpush.xpose.msra.mxu0 0.0
    %190 = vmatpush.xpose.msra.mxu0 0.0
    %191 = vmatpush.xpose.msra.mxu0 0.0
    %192 = vmatpush.xpose.msra.mxu0 0.0
    %193 = vmatpush.xpose.msra.mxu0 0.0
    %194 = vmatpush.xpose.msra.mxu0 0.0
    %195 = vmatpush.xpose.msra.mxu0 0.0
    %196 = vmatpush.xpose.msra.mxu0 0.0
    %197 = vmatpush.xpose.msra.mxu0 0.0
    %198 = vmatpush.xpose.msra.mxu0 0.0
    %199 = vmatpush.xpose.msra.mxu0 0.0
    %200 = vmatpush.xpose.msra.mxu0 0.0
    %201 = vmatpush.xpose.msra.mxu0 0.0
    %202 = vmatpush.xpose.msra.mxu0 0.0
    %203 = vmatpush.xpose.msra.mxu0 0.0
    %204 = vmatpush.xpose.msra.mxu0 %v183
    %205 = vmatmul.f32.gmra.mxu0 %v186
    %v206 = vpop.f32.mrf.mxu0
    %v207 = vadd.f32 0.0, %v206
    %208 = vdwg.mxu0
    %209 = vmatpush.xpose.msra.mxu0 0.0
    %210 = vmatpush.xpose.msra.mxu0 0.0
    %211 = vmatpush.xpose.msra.mxu0 0.0
    %212 = vmatpush.xpose.msra.mxu0 0.0
    %213 = vmatpush.xpose.msra.mxu0 0.0
    %214 = vmatpush.xpose.msra.mxu0 0.0
    %215 = vmatpush.xpose.msra.mxu0 0.0
    %216 = vmatpush.xpose.msra.mxu0 0.0
    %217 = vmatpush.xpose.msra.mxu0 0.0
    %218 = vmatpush.xpose.msra.mxu0 0.0
    %219 = vmatpush.xpose.msra.mxu0 0.0
    %220 = vmatpush.xpose.msra.mxu0 0.0
    %221 = vmatpush.xpose.msra.mxu0 0.0
    %222 = vmatpush.xpose.msra.mxu0 0.0
    %223 = vmatpush.xpose.msra.mxu0 0.0
    %224 = vmatpush.xpose.msra.mxu0 %v184
    %225 = vmatmul.f32.gmra.mxu0 %v187
    %v226 = vpop.f32.mrf.mxu0
    %v227 = vadd.f32 %v207, %v226
    %228 = vdwg.mxu0
    %229 = vmatpush.xpose.msra.mxu0 0.0
    %230 = vmatpush.xpose.msra.mxu0 0.0
    %231 = vmatpush.xpose.msra.mxu0 0.0
    %232 = vmatpush.xpose.msra.mxu0 0.0
    %233 = vmatpush.xpose.msra.mxu0 0.0
    %234 = vmatpush.xpose.msra.mxu0 0.0
    %235 = vmatpush.xpose.msra.mxu0 0.0
    %236 = vmatpush.xpose.msra.mxu0 0.0
    %237 = vmatpush.xpose.msra.mxu0 0.0
    %238 = vmatpush.xpose.msra.mxu0 0.0
    %239 = vmatpush.xpose.msra.mxu0 0.0
    %240 = vmatpush.xpose.msra.mxu0 0.0
    %241 = vmatpush.xpose.msra.mxu0 0.0
    %242 = vmatpush.xpose.msra.mxu0 0.0
    %243 = vmatpush.xpose.msra.mxu0 0.0
    %244 = vmatpush.xpose.msra.mxu0 %v185
    %245 = vmatmul.f32.gmra.mxu0 %v188
    %v246 = vpop.f32.mrf.mxu0
    %v247 = vadd.f32 %v227, %v246
    %248 = vdwg.mxu0
    %vm249 = vcmask 64512
    %250 = vst.msk [vmem:[#allocation11] sm:$0xff] %vm249, %v247
    // Predicated region
    $region42: #{tpu_custom_call.1} parent=1 // pred_check
      _
    $region43: #{tpu_custom_call.1} parent=1 // pred_check_branch
      %252 = sbr.rel (0) target = $region45
    $region44: #{tpu_custom_call.1} parent=1 // pred_region
      %254 = vsyncadd [#allocation4], 0
      %s256 = sshll.u32 [#allocation11], 4
      %s257 = int_to_ptr.vmem [resolvable:$true] %s256
      %s258 = sshll.u32 %s5, 4
      %s259 = int_to_ptr.hbm [resolvable:$true] %s258
      %261 = dma.vmem_to_hbm [thread:$0]  %s257, 128, %s259, [#allocation4]
    $region45: #{tpu_custom_call.1} parent=1 // pred_fallthru
      _
    // Predicated region
    $region46: #{tpu_custom_call.1} parent=1 // pred_check
      _
    $region47: #{tpu_custom_call.1} parent=1 // pred_check_branch
      %263 = sbr.rel (0) target = $region49
    $region48: #{tpu_custom_call.1} parent=1 // pred_region
      %265 = dma.done [#allocation4], 128
    $region49: #{tpu_custom_call.1} parent=1 // pred_fallthru
      _
    %266 = vsyncpa [#allocation3], 1
    %267 = vsyncpa [#allocation6], 1
    %268 = vsyncpa [#allocation9], 1
    %269 = vsyncpa [#allocation4], 1

</llo_original>
